<compile_context>
chip_gen: v5e
topology: v5e:2x2
jax: 0.10.0
libtpu: 0.0.40
codegen_flags: <defaults>
</compile_context>

<pallas_src>
import functools
import math

import jax
import jax.numpy as jnp
from jax import lax
from jax.experimental import pallas as pl
from jax.experimental.pallas import tpu as pltpu


def _softplus(x):
    # matches torch.nn.Softplus (beta=1) numerically in fp32
    return jnp.log1p(jnp.exp(-jnp.abs(x))) + jnp.maximum(x, 0.0)


def _moe_gate_kernel(x_ref, w1_ref, wgb_ref, gates_ref, *, num_heads, top_k,
                     noise_eps, train, embed_dim, num_experts):
    E = embed_dim
    N = num_experts
    H = num_heads
    S = E                         # key sequence length (= rows of expert_keys)
    Bp = x_ref.shape[0]

    X = x_ref[...]                                                     # (Bp, F)

    # Fused query projection + all-head attention scores in one lane-dense MXU
    # matmul against W1 = Wq_aug @ KBD (precomputed in the wrapper).
    s = jnp.dot(X, w1_ref[...], preferred_element_type=jnp.float32)    # (Bp, H*S)

    # Per-head softmax (exact per-head max shift) + average over heads.
    attn_avg = jnp.zeros((Bp, S), jnp.float32)
    for h in range(H):
        seg = s[:, h * S:(h + 1) * S]                                  # (Bp, S)
        seg = seg - jnp.max(seg, axis=-1, keepdims=True)
        p = jnp.exp(seg)
        p = p * pl.reciprocal(jnp.sum(p, axis=-1, keepdims=True), approx=True)
        attn_avg = attn_avg + p
    attn_avg = attn_avg * (1.0 / H)                                    # (Bp, S)

    # expert_weight = softmax(attn_weights, dim=-1)  (second softmax, as in module)
    ew = jnp.exp(attn_avg - jnp.max(attn_avg, axis=-1, keepdims=True))
    expert_weight = ew * pl.reciprocal(jnp.sum(ew, axis=-1, keepdims=True),
                                       approx=True)                    # (Bp, E)

    # fc_gate and fc_noise in one matmul (weights rows 0..E-1, biases row E).
    lg = jnp.dot(expert_weight, wgb_ref[0:E, :],
                 preferred_element_type=jnp.float32) + wgb_ref[E:E + 1, :]   # (Bp, 2N)
    clean_logits = lg[:, 0:N]
    if train:
        raw_noise = lg[:, N:2 * N]
        noise_stddev = _softplus(raw_noise) + noise_eps
        randn = X[:, E + 2:E + 2 + N]                                  # (Bp, N)
        logits = clean_logits + randn * noise_stddev
    else:
        logits = clean_logits

    # top-k selection (iterative argmax, first-occurrence ties like torch.topk),
    # softmax over the k selected logits, scatter into a lane-dense output slab.
    iota_n = lax.broadcasted_iota(jnp.int32, (Bp, N), 1)
    v0 = jnp.max(logits, axis=-1, keepdims=True)
    i0 = jnp.min(jnp.where(logits == v0, iota_n, N), axis=-1, keepdims=True)
    work = jnp.where(iota_n == i0, -jnp.inf, logits)
    top_vals, top_idx = [v0], [i0]
    for _ in range(1, top_k):
        vk = jnp.max(work, axis=-1, keepdims=True)
        ik = jnp.min(jnp.where(work == vk, iota_n, N), axis=-1, keepdims=True)
        top_vals.append(vk)
        top_idx.append(ik)
        work = jnp.where(iota_n == ik, -jnp.inf, work)

    # exp(v0 - v0) == 1 exactly -> one fewer EUP exp per row.
    exps = [jnp.ones_like(v0)] + [jnp.exp(v - v0) for v in top_vals[1:]]
    denom = exps[0]
    for e in exps[1:]:
        denom = denom + e
    inv_denom = 1.0 / denom      # exact divide: keeps sum(gates, -1) == 1 tightly

    out_lanes = gates_ref.shape[-1]
    iota_out = lax.broadcasted_iota(jnp.int32, (Bp, out_lanes), 1)
    gates = jnp.zeros((Bp, out_lanes), jnp.float32)
    for kk in range(top_k):
        gates = gates + jnp.where(iota_out == top_idx[kk], exps[kk] * inv_denom, 0.0)
    gates_ref[...] = gates


def init_params(key, expert_nums, embed_dim=32):
    ks = jax.random.split(key, 12)

    def nrm(k, shape, scale=0.1):
        return scale * jax.random.normal(k, shape, dtype=jnp.float32)

    return dict(
        embed_table=nrm(ks[0], (5, embed_dim), 1.0),       # nn.Embedding(5, E)
        noise_embed_w=nrm(ks[1], (embed_dim, 1)),          # nn.Linear(1, E)
        noise_embed_b=nrm(ks[2], (embed_dim,)),
        wq=nrm(ks[3], (embed_dim, embed_dim)),             # MHA in_proj (query slice)
        bq=nrm(ks[4], (embed_dim,)),
        wk=nrm(ks[5], (embed_dim, embed_dim)),             # MHA in_proj (key slice)
        bk=nrm(ks[6], (embed_dim,)),
        expert_keys=nrm(ks[7], (embed_dim, embed_dim), 1.0),
        fc_gate_w=nrm(ks[8], (expert_nums, embed_dim)),
        fc_gate_b=nrm(ks[9], (expert_nums,)),
        fc_noise_w=nrm(ks[10], (expert_nums, embed_dim)),
        fc_noise_b=nrm(ks[11], (expert_nums,)),
    )


def moe_gate_pallas(taskID, noise_level, params, *, num_heads=4, top_k=2,
                    noise_epsilon=0.01, alpha=0.7, train=True, noise_key=None):
    """taskID / noise_level: (B,) for a single gate call, or (G, B) for G stacked
    gate invocations processed with a parallel grid (parameters stay VMEM-resident)."""
    f32 = jnp.float32
    hi = lax.Precision.HIGHEST

    squeeze_g = (taskID.ndim == 1)
    tid = taskID[None, :] if squeeze_g else taskID                     # (G, B)
    nl = noise_level[None, :] if squeeze_g else noise_level            # (G, B)
    G, B = tid.shape

    E = params["embed_table"].shape[1]
    N = params["fc_gate_w"].shape[0]
    H = num_heads
    assert E % H == 0 and 1 <= top_k <= N
    d = E // H
    S = E
    HS = H * S
    F = E + 2 + (N if train else 0)
    out_lanes = max(128, pl.cdiv(N, 128) * 128)

    # ---- parameter-only precompute (hoisted out of the kernel) --------------
    wq_t = params["wq"].T.astype(f32)                                  # (E, E)
    w_ne = params["noise_embed_w"].reshape(1, E).astype(f32)           # Linear(1,E) weight row
    b_ne = params["noise_embed_b"].reshape(1, E).astype(f32)
    bq = params["bq"].reshape(1, E).astype(f32)

    # q = [task_emb | noise | 1 (| randn)] @ Wq_aug   (alpha-mix, noise-embed, bias folded)
    rows = [alpha * wq_t,
            (1.0 - alpha) * jnp.dot(w_ne, wq_t, precision=hi),
            (1.0 - alpha) * jnp.dot(b_ne, wq_t, precision=hi) + bq]
    if train:
        rows.append(jnp.zeros((N, E), f32))     # randn columns do not feed q
    wq_aug = jnp.concatenate(rows, axis=0)                              # (F, E)

    # Key projection (parameter-only) and block-diagonal, pre-scaled key matrix.
    K = (jnp.dot(params["expert_keys"].astype(f32), params["wk"].T.astype(f32),
                 precision=hi) + params["bk"].reshape(1, E).astype(f32))  # (S, E)
    scale = 1.0 / math.sqrt(d)
    kbd = jax.scipy.linalg.block_diag(
        *[K[:, h * d:(h + 1) * d].T * scale for h in range(H)])          # (E, HS)

    # One fused score weight: s = X @ W1  with  W1 = Wq_aug @ KBD.
    w1 = jnp.dot(wq_aug, kbd, precision=hi)                              # (F, HS)

    # fc_gate / fc_noise weights + biases packed into one slab (E+1, 2N).
    wgb = jnp.concatenate([
        jnp.concatenate([params["fc_gate_w"].T.astype(f32),
                         params["fc_noise_w"].T.astype(f32)], axis=1),   # (E, 2N)
        jnp.concatenate([params["fc_gate_b"].reshape(1, N).astype(f32),
                         params["fc_noise_b"].reshape(1, N).astype(f32)], axis=1),
    ], axis=0)                                                           # (E+1, 2N)

    # ---- per-call data slab, batch padded to a multiple of 8 sublanes --------
    Bp = ((B + 7) // 8) * 8
    pad = Bp - B
    tid_p = jnp.pad(tid, ((0, 0), (0, pad)))            # pad rows use task index 0
    nl_p = jnp.pad(nl.astype(f32), ((0, 0), (0, pad)))
    task_emb = jnp.take(params["embed_table"].astype(f32), tid_p, axis=0)  # (G,Bp,E)
    cols = [task_emb, nl_p[..., None], jnp.ones((G, Bp, 1), f32)]
    if train:
        if noise_key is None:
            noise_key = jax.random.PRNGKey(0)
        cols.append(jax.random.normal(noise_key, (G, Bp, N), dtype=f32))
    x = jnp.concatenate(cols, axis=-1)                                   # (G, Bp, F)

    kernel = functools.partial(
        _moe_gate_kernel, num_heads=H, top_k=top_k, noise_eps=noise_epsilon,
        train=train, embed_dim=E, num_experts=N)

    gates_pad = pl.pallas_call(
        kernel,
        out_shape=jax.ShapeDtypeStruct((G, Bp, out_lanes), f32),
        grid=(G,),
        in_specs=[
            pl.BlockSpec((None, Bp, F), lambda g: (g, 0, 0)),        # per-step data
            pl.BlockSpec((F, HS), lambda g: (0, 0)),                 # resident W1
            pl.BlockSpec((E + 1, 2 * N), lambda g: (0, 0)),          # resident WGB
        ],
        out_specs=pl.BlockSpec((None, Bp, out_lanes), lambda g: (g, 0, 0)),
        compiler_params=pltpu.CompilerParams(
            dimension_semantics=("parallel",)),
    )(x, w1, wgb)

    gates = gates_pad[:, :B, :N]              # strip batch pad + lane pad
    load = jnp.sum(gates, axis=1)             # _gates_to_load: gates.sum(0)
    if squeeze_g:
        return gates[0], load[0]
    return gates, load


if __name__ == "__main__":
    expert_nums, embed_dim, num_heads, top_k = 8, 32, 4, 2

    key = jax.random.PRNGKey(0)
    pkey, nkey = jax.random.split(key)
    params = init_params(pkey, expert_nums, embed_dim)

    taskID = jnp.array([2, 2, 1, 1], dtype=jnp.int32)
    noise_level = jnp.array([40.6894, 64.7654, 58.0406, 36.7331], dtype=jnp.float32)

    gate_fn = jax.jit(functools.partial(
        moe_gate_pallas, num_heads=num_heads, top_k=top_k, train=True))
    gates, load = gate_fn(taskID, noise_level, params, noise_key=nkey)
    jax.block_until_ready((gates, load))

    B = taskID.shape[0]
    assert gates.shape == (B, expert_nums)
    assert load.shape == (expert_nums,)
    assert bool(jnp.all(jnp.isfinite(gates)))
    # each row is a softmax over its top_k selected logits scattered into N slots
    assert bool(jnp.allclose(jnp.sum(gates, axis=-1), 1.0, atol=1e-4))
    assert bool(jnp.all(jnp.sum((gates > 0).astype(jnp.int32), axis=-1) == top_k))
    assert bool(jnp.allclose(load, jnp.sum(gates, axis=0), atol=1e-6))

    print("KERNEL_OK")
</pallas_src>

<mosaic_0001>
module attributes {stable_mosaic.version = 11 : i64} {
  func.func @_moe_gate_kernel(%arg0: i32, %arg1: memref<1x8x42xf32, #tpu.memory_space<vmem>>, %arg2: memref<42x128xf32, #tpu.memory_space<vmem>>, %arg3: memref<33x16xf32, #tpu.memory_space<vmem>>, %arg4: memref<1x8x128xf32, #tpu.memory_space<vmem>>) attributes {dimension_semantics = [#tpu.dimension_semantics<parallel>], iteration_bounds = array<i64: 1>, scalar_prefetch = 0 : i64, scratch_operands = 0 : i64, tpu.core_type = #tpu.core_type<tc>, window_params = [{transform_indices = @transform_0, window_bounds = array<i64: 1, 8, 42>}, {pipeline_mode = #tpu.pipeline_mode<synchronous>, transform_indices = @transform_1, window_bounds = array<i64: 42, 128>}, {pipeline_mode = #tpu.pipeline_mode<synchronous>, transform_indices = @transform_2, window_bounds = array<i64: 33, 16>}, {transform_indices = @transform_3, window_bounds = array<i64: 1, 8, 128>}]} {
    %c0 = arith.constant 0 : index
    %c0_0 = arith.constant 0 : index
    %c0_1 = arith.constant 0 : index
    %0 = vector.load %arg1[%c0, %c0_0, %c0_1] : memref<1x8x42xf32, #tpu.memory_space<vmem>>, vector<1x8x42xf32>
    %1 = vector.shape_cast %0 : vector<1x8x42xf32> to vector<8x42xf32>
    %c0_2 = arith.constant 0 : index
    %c0_3 = arith.constant 0 : index
    %2 = vector.load %arg2[%c0_2, %c0_3] : memref<42x128xf32, #tpu.memory_space<vmem>>, vector<42x128xf32>
    %cst = arith.constant dense<0.000000e+00> : vector<8x128xf32>
    %3 = tpu.matmul %1, %2, %cst {dimension_numbers = #tpu.dot_dimension_numbers<[1], [0], [0], [1], [0, 0, 1, 1], [], []>} : vector<8x42xf32>, vector<42x128xf32>, vector<8x128xf32> -> vector<8x128xf32>
    %cst_4 = arith.constant 0.000000e+00 : f32
    %4 = vector.broadcast %cst_4 : f32 to vector<8x32xf32>
    %5 = vector.extract_strided_slice %3 {offsets = [0, 0], sizes = [8, 32], strides = [1, 1]} : vector<8x128xf32> to vector<8x32xf32>
    %cst_5 = arith.constant dense<0xFF800000> : vector<8xf32>
    %6 = vector.multi_reduction <maximumf>, %5, %cst_5 [1] : vector<8x32xf32> to vector<8xf32>
    %7 = vector.shape_cast %6 : vector<8xf32> to vector<8x1xf32>
    %8 = vector.broadcast %7 : vector<8x1xf32> to vector<8x32xf32>
    %9 = arith.subf %5, %8 : vector<8x32xf32>
    %10 = math.exp %9 : vector<8x32xf32>
    %cst_6 = arith.constant dense<0.000000e+00> : vector<8xf32>
    %11 = vector.multi_reduction <add>, %10, %cst_6 [1] : vector<8x32xf32> to vector<8xf32>
    %12 = vector.shape_cast %11 : vector<8xf32> to vector<8x1xf32>
    %13 = tpu.reciprocal %12 {approx = true} : vector<8x1xf32> -> vector<8x1xf32>
    %14 = vector.broadcast %13 : vector<8x1xf32> to vector<8x32xf32>
    %15 = arith.mulf %10, %14 : vector<8x32xf32>
    %16 = arith.addf %4, %15 : vector<8x32xf32>
    %17 = vector.extract_strided_slice %3 {offsets = [0, 32], sizes = [8, 32], strides = [1, 1]} : vector<8x128xf32> to vector<8x32xf32>
    %cst_7 = arith.constant dense<0xFF800000> : vector<8xf32>
    %18 = vector.multi_reduction <maximumf>, %17, %cst_7 [1] : vector<8x32xf32> to vector<8xf32>
    %19 = vector.shape_cast %18 : vector<8xf32> to vector<8x1xf32>
    %20 = vector.broadcast %19 : vector<8x1xf32> to vector<8x32xf32>
    %21 = arith.subf %17, %20 : vector<8x32xf32>
    %22 = math.exp %21 : vector<8x32xf32>
    %cst_8 = arith.constant dense<0.000000e+00> : vector<8xf32>
    %23 = vector.multi_reduction <add>, %22, %cst_8 [1] : vector<8x32xf32> to vector<8xf32>
    %24 = vector.shape_cast %23 : vector<8xf32> to vector<8x1xf32>
    %25 = tpu.reciprocal %24 {approx = true} : vector<8x1xf32> -> vector<8x1xf32>
    %26 = vector.broadcast %25 : vector<8x1xf32> to vector<8x32xf32>
    %27 = arith.mulf %22, %26 : vector<8x32xf32>
    %28 = arith.addf %16, %27 : vector<8x32xf32>
    %29 = vector.extract_strided_slice %3 {offsets = [0, 64], sizes = [8, 32], strides = [1, 1]} : vector<8x128xf32> to vector<8x32xf32>
    %cst_9 = arith.constant dense<0xFF800000> : vector<8xf32>
    %30 = vector.multi_reduction <maximumf>, %29, %cst_9 [1] : vector<8x32xf32> to vector<8xf32>
    %31 = vector.shape_cast %30 : vector<8xf32> to vector<8x1xf32>
    %32 = vector.broadcast %31 : vector<8x1xf32> to vector<8x32xf32>
    %33 = arith.subf %29, %32 : vector<8x32xf32>
    %34 = math.exp %33 : vector<8x32xf32>
    %cst_10 = arith.constant dense<0.000000e+00> : vector<8xf32>
    %35 = vector.multi_reduction <add>, %34, %cst_10 [1] : vector<8x32xf32> to vector<8xf32>
    %36 = vector.shape_cast %35 : vector<8xf32> to vector<8x1xf32>
    %37 = tpu.reciprocal %36 {approx = true} : vector<8x1xf32> -> vector<8x1xf32>
    %38 = vector.broadcast %37 : vector<8x1xf32> to vector<8x32xf32>
    %39 = arith.mulf %34, %38 : vector<8x32xf32>
    %40 = arith.addf %28, %39 : vector<8x32xf32>
    %41 = vector.extract_strided_slice %3 {offsets = [0, 96], sizes = [8, 32], strides = [1, 1]} : vector<8x128xf32> to vector<8x32xf32>
    %cst_11 = arith.constant dense<0xFF800000> : vector<8xf32>
    %42 = vector.multi_reduction <maximumf>, %41, %cst_11 [1] : vector<8x32xf32> to vector<8xf32>
    %43 = vector.shape_cast %42 : vector<8xf32> to vector<8x1xf32>
    %44 = vector.broadcast %43 : vector<8x1xf32> to vector<8x32xf32>
    %45 = arith.subf %41, %44 : vector<8x32xf32>
    %46 = math.exp %45 : vector<8x32xf32>
    %cst_12 = arith.constant dense<0.000000e+00> : vector<8xf32>
    %47 = vector.multi_reduction <add>, %46, %cst_12 [1] : vector<8x32xf32> to vector<8xf32>
    %48 = vector.shape_cast %47 : vector<8xf32> to vector<8x1xf32>
    %49 = tpu.reciprocal %48 {approx = true} : vector<8x1xf32> -> vector<8x1xf32>
    %50 = vector.broadcast %49 : vector<8x1xf32> to vector<8x32xf32>
    %51 = arith.mulf %46, %50 : vector<8x32xf32>
    %52 = arith.addf %40, %51 : vector<8x32xf32>
    %cst_13 = arith.constant 2.500000e-01 : f32
    %53 = vector.broadcast %cst_13 : f32 to vector<8x32xf32>
    %54 = arith.mulf %52, %53 : vector<8x32xf32>
    %cst_14 = arith.constant dense<0xFF800000> : vector<8xf32>
    %55 = vector.multi_reduction <maximumf>, %54, %cst_14 [1] : vector<8x32xf32> to vector<8xf32>
    %56 = vector.shape_cast %55 : vector<8xf32> to vector<8x1xf32>
    %57 = vector.broadcast %56 : vector<8x1xf32> to vector<8x32xf32>
    %58 = arith.subf %54, %57 : vector<8x32xf32>
    %59 = math.exp %58 : vector<8x32xf32>
    %cst_15 = arith.constant dense<0.000000e+00> : vector<8xf32>
    %60 = vector.multi_reduction <add>, %59, %cst_15 [1] : vector<8x32xf32> to vector<8xf32>
    %61 = vector.shape_cast %60 : vector<8xf32> to vector<8x1xf32>
    %62 = tpu.reciprocal %61 {approx = true} : vector<8x1xf32> -> vector<8x1xf32>
    %63 = vector.broadcast %62 : vector<8x1xf32> to vector<8x32xf32>
    %64 = arith.mulf %59, %63 : vector<8x32xf32>
    %c0_16 = arith.constant 0 : index
    %c0_17 = arith.constant 0 : index
    %65 = vector.load %arg3[%c0_16, %c0_17] : memref<33x16xf32, #tpu.memory_space<vmem>>, vector<32x16xf32>
    %cst_18 = arith.constant dense<0.000000e+00> : vector<8x16xf32>
    %66 = tpu.matmul %64, %65, %cst_18 {dimension_numbers = #tpu.dot_dimension_numbers<[1], [0], [0], [1], [0, 0, 1, 1], [], []>} : vector<8x32xf32>, vector<32x16xf32>, vector<8x16xf32> -> vector<8x16xf32>
    %c32 = arith.constant 32 : index
    %c0_19 = arith.constant 0 : index
    %67 = vector.load %arg3[%c32, %c0_19] : memref<33x16xf32, #tpu.memory_space<vmem>>, vector<1x16xf32>
    %68 = vector.broadcast %67 : vector<1x16xf32> to vector<8x16xf32>
    %69 = arith.addf %66, %68 : vector<8x16xf32>
    %70 = vector.extract_strided_slice %69 {offsets = [0, 0], sizes = [8, 8], strides = [1, 1]} : vector<8x16xf32> to vector<8x8xf32>
    %71 = vector.extract_strided_slice %69 {offsets = [0, 8], sizes = [8, 8], strides = [1, 1]} : vector<8x16xf32> to vector<8x8xf32>
    %72 = math.absf %71 : vector<8x8xf32>
    %cst_20 = arith.constant 0.000000e+00 : f32
    %73 = vector.broadcast %cst_20 : f32 to vector<8x8xf32>
    %74 = arith.subf %73, %72 : vector<8x8xf32>
    %75 = math.exp %74 : vector<8x8xf32>
    %76 = math.log1p %75 : vector<8x8xf32>
    %cst_21 = arith.constant 0.000000e+00 : f32
    %77 = vector.broadcast %cst_21 : f32 to vector<8x8xf32>
    %78 = arith.maximumf %71, %77 : vector<8x8xf32>
    %79 = arith.addf %76, %78 : vector<8x8xf32>
    %cst_22 = arith.constant 0.00999999977 : f32
    %80 = vector.broadcast %cst_22 : f32 to vector<8x8xf32>
    %81 = arith.addf %79, %80 : vector<8x8xf32>
    %82 = vector.extract_strided_slice %1 {offsets = [0, 34], sizes = [8, 8], strides = [1, 1]} : vector<8x42xf32> to vector<8x8xf32>
    %83 = arith.mulf %82, %81 : vector<8x8xf32>
    %84 = arith.addf %70, %83 : vector<8x8xf32>
    %85 = tpu.iota {dimensions = array<i32: 1>} : vector<8x8xi32>
    %cst_23 = arith.constant dense<0xFF800000> : vector<8xf32>
    %86 = vector.multi_reduction <maximumf>, %84, %cst_23 [1] : vector<8x8xf32> to vector<8xf32>
    %87 = vector.shape_cast %86 : vector<8xf32> to vector<8x1xf32>
    %88 = vector.broadcast %87 : vector<8x1xf32> to vector<8x8xf32>
    %89 = arith.cmpf oeq, %84, %88 : vector<8x8xf32>
    %c8_i32 = arith.constant 8 : i32
    %90 = vector.broadcast %c8_i32 : i32 to vector<8x8xi32>
    %91 = arith.select %89, %85, %90 : vector<8x8xi1>, vector<8x8xi32>
    %cst_24 = arith.constant dense<2147483647> : vector<8xi32>
    %92 = vector.multi_reduction <minsi>, %91, %cst_24 [1] : vector<8x8xi32> to vector<8xi32>
    %93 = vector.shape_cast %92 : vector<8xi32> to vector<8x1xi32>
    %94 = vector.broadcast %93 : vector<8x1xi32> to vector<8x8xi32>
    %95 = arith.cmpi eq, %85, %94 : vector<8x8xi32>
    %cst_25 = arith.constant 0xFF800000 : f32
    %96 = vector.broadcast %cst_25 : f32 to vector<8x8xf32>
    %97 = arith.select %95, %96, %84 : vector<8x8xi1>, vector<8x8xf32>
    %cst_26 = arith.constant dense<0xFF800000> : vector<8xf32>
    %98 = vector.multi_reduction <maximumf>, %97, %cst_26 [1] : vector<8x8xf32> to vector<8xf32>
    %99 = vector.shape_cast %98 : vector<8xf32> to vector<8x1xf32>
    %100 = vector.broadcast %99 : vector<8x1xf32> to vector<8x8xf32>
    %101 = arith.cmpf oeq, %97, %100 : vector<8x8xf32>
    %c8_i32_27 = arith.constant 8 : i32
    %102 = vector.broadcast %c8_i32_27 : i32 to vector<8x8xi32>
    %103 = arith.select %101, %85, %102 : vector<8x8xi1>, vector<8x8xi32>
    %cst_28 = arith.constant dense<2147483647> : vector<8xi32>
    %104 = vector.multi_reduction <minsi>, %103, %cst_28 [1] : vector<8x8xi32> to vector<8xi32>
    %105 = vector.shape_cast %104 : vector<8xi32> to vector<8x1xi32>
    %cst_29 = arith.constant 1.000000e+00 : f32
    %106 = vector.broadcast %cst_29 : f32 to vector<8x1xf32>
    %107 = arith.subf %99, %87 : vector<8x1xf32>
    %108 = math.exp %107 : vector<8x1xf32>
    %109 = arith.addf %106, %108 : vector<8x1xf32>
    %cst_30 = arith.constant 1.000000e+00 : f32
    %110 = vector.broadcast %cst_30 : f32 to vector<8x1xf32>
    %111 = arith.divf %110, %109 : vector<8x1xf32>
    %112 = tpu.iota {dimensions = array<i32: 1>} : vector<8x128xi32>
    %cst_31 = arith.constant 0.000000e+00 : f32
    %113 = vector.broadcast %cst_31 : f32 to vector<8x128xf32>
    %114 = vector.broadcast %93 : vector<8x1xi32> to vector<8x128xi32>
    %115 = arith.cmpi eq, %112, %114 : vector<8x128xi32>
    %116 = arith.mulf %106, %111 : vector<8x1xf32>
    %cst_32 = arith.constant 0.000000e+00 : f32
    %117 = vector.shape_cast %116 : vector<8x1xf32> to vector<8x1xf32>
    %118 = vector.broadcast %117 : vector<8x1xf32> to vector<8x128xf32>
    %119 = vector.broadcast %cst_32 : f32 to vector<8x128xf32>
    %120 = arith.select %115, %118, %119 : vector<8x128xi1>, vector<8x128xf32>
    %121 = arith.addf %113, %120 : vector<8x128xf32>
    %122 = vector.broadcast %105 : vector<8x1xi32> to vector<8x128xi32>
    %123 = arith.cmpi eq, %112, %122 : vector<8x128xi32>
    %124 = arith.mulf %108, %111 : vector<8x1xf32>
    %cst_33 = arith.constant 0.000000e+00 : f32
    %125 = vector.shape_cast %124 : vector<8x1xf32> to vector<8x1xf32>
    %126 = vector.broadcast %125 : vector<8x1xf32> to vector<8x128xf32>
    %127 = vector.broadcast %cst_33 : f32 to vector<8x128xf32>
    %128 = arith.select %123, %126, %127 : vector<8x128xi1>, vector<8x128xf32>
    %129 = arith.addf %121, %128 : vector<8x128xf32>
    %c0_34 = arith.constant 0 : index
    %c0_35 = arith.constant 0 : index
    %c0_36 = arith.constant 0 : index
    %130 = vector.load %arg4[%c0_34, %c0_35, %c0_36] : memref<1x8x128xf32, #tpu.memory_space<vmem>>, vector<1x8x128xf32>
    %131 = vector.shape_cast %130 : vector<1x8x128xf32> to vector<8x128xf32>
    %132 = vector.shape_cast %129 : vector<8x128xf32> to vector<1x8x128xf32>
    tpu.vector_store %arg4[%c0_34, %c0_35, %c0_36], %132 {strides = array<i32>} : memref<1x8x128xf32, #tpu.memory_space<vmem>>, vector<1x8x128xf32>,
    return
  }
  func.func @transform_0(%arg0: i32) -> (i32, i32, i32) {
    %c0_i32 = arith.constant 0 : i32
    %c0_i32_0 = arith.constant 0 : i32
    %c0_i32_1 = arith.constant 0 : i32
    return %arg0, %c0_i32, %c0_i32_0 : i32, i32, i32
  }
  func.func @transform_1(%arg0: i32) -> (i32, i32) {
    %c0_i32 = arith.constant 0 : i32
    %c0_i32_0 = arith.constant 0 : i32
    %c0_i32_1 = arith.constant 0 : i32
    return %c0_i32, %c0_i32_0 : i32, i32
  }
  func.func @transform_2(%arg0: i32) -> (i32, i32) {
    %c0_i32 = arith.constant 0 : i32
    %c0_i32_0 = arith.constant 0 : i32
    %c0_i32_1 = arith.constant 0 : i32
    return %c0_i32, %c0_i32_0 : i32, i32
  }
  func.func @transform_3(%arg0: i32) -> (i32, i32, i32) {
    %c0_i32 = arith.constant 0 : i32
    %c0_i32_0 = arith.constant 0 : i32
    %c0_i32_1 = arith.constant 0 : i32
    return %arg0, %c0_i32, %c0_i32_0 : i32, i32, i32
  }
}

</mosaic_0001>

<llo_original>
// kernel: moe_gate_pallas.1
$region0: #{moe_gate_pallas.1}
  #allocation0 [shape = 'u32[]', space=smem, size = 0x4, offset = 0x4, fixed_abs, tag = 'smem constant byte address 0x4 - core index']
  #allocation1 [shape = 'u32[72,128]{1,0:T(1,128)}', space=vmem, size = 0x9000, scoped, tag = 'internal scratch']
  %s0 = inlined_call_operand.vmem [shape: f32[1,8,42], index: 0, kind: input, shape index: {}]
  %s1 = inlined_call_operand.vmem [shape: f32[42,128], index: 1, kind: input, shape index: {}]
  %s2 = inlined_call_operand.vmem [shape: f32[33,16], index: 2, kind: input, shape index: {}]
  %s3 = inlined_call_operand.vmem [shape: f32[1,8,128], index: 3, kind: output, shape index: {}]
  %s4 = sld [smem:[#allocation0]]
  $region22: #{moe_gate_pallas.1} parent=0
    _
  %s6 = ssub.s32 1, %s4
  %s7 = scalar_select 0, %s6, %s4
  // Predicated region
  $region2: #{moe_gate_pallas.1} parent=0 // pred_check
    _
  $region3: #{moe_gate_pallas.1} parent=0 // pred_check_branch
    %9 = sbr.rel (0) target = $region5
  $region4: #{moe_gate_pallas.1} parent=0 // pred_region
    _
  $region5: #{moe_gate_pallas.1} parent=0 // pred_fallthru
    _
  // Predicated region
  $region6: #{moe_gate_pallas.1} parent=0 // pred_check
    _
  $region7: #{moe_gate_pallas.1} parent=0 // pred_check_branch
    %11 = sbr.rel (0) target = $region9
  $region8: #{moe_gate_pallas.1} parent=0 // pred_region
    _
  $region9: #{moe_gate_pallas.1} parent=0 // pred_fallthru
    _
  // Predicated region
  $region10: #{moe_gate_pallas.1} parent=0 // pred_check
    _
  $region11: #{moe_gate_pallas.1} parent=0 // pred_check_branch
    %13 = sbr.rel (0) target = $region13
  $region12: #{moe_gate_pallas.1} parent=0 // pred_region
    _
  $region13: #{moe_gate_pallas.1} parent=0 // pred_fallthru
    _
  %v14 = vld [vmem:[%s0] sm:$0xff]
  %v15 = vld [vmem:[%s1] sm:$0xff]
  %v16 = vld [vmem:[%s1 + $0x8] sm:$0xff]
  %v17 = vld [vmem:[%s1 + $0x10] sm:$0xff]
  %v18 = vld [vmem:[%s1 + $0x18] sm:$0xff]
  %v19 = vld [vmem:[%s1 + $0x20] sm:$0xff]
  %v20 = vld [vmem:[%s1 + $0x28] sm:$0x3]
  %vm21 = vcmask 343040
  %v23 = vsel %vm21, %v14, 0
  %vm25 = vcmask 1041408
  %v27 = vsel %vm25, %v20, 0
  %29 = vmatpush.msra.mxu0 0.0
  %30 = vmatpush.msra.mxu0 0.0
  %31 = vmatpush.msra.mxu0 0.0
  %32 = vmatpush.msra.mxu0 0.0
  %33 = vmatpush.msra.mxu0 0.0
  %34 = vmatpush.msra.mxu0 0.0
  %35 = vmatpush.msra.mxu0 0.0
  %36 = vmatpush.msra.mxu0 0.0
  %37 = vmatpush.msra.mxu0 0.0
  %38 = vmatpush.msra.mxu0 0.0
  %39 = vmatpush.msra.mxu0 %v27
  %40 = vmatpush.msra.mxu0 %v19
  %41 = vmatpush.msra.mxu0 %v18
  %42 = vmatpush.msra.mxu0 %v17
  %43 = vmatpush.msra.mxu0 %v16
  %44 = vmatpush.msra.mxu0 %v15
  %45 = vmatmul.f32.gmra.mxu0 %v23
  %v46 = vpop.f32.mrf.mxu0
  %v47 = vadd.f32 0.0, %v46
  %48 = vdwg.mxu0
  %vm49 = vcmask 261120
  %v50 = vsel %vm49, %v47, -inf
  %51 = vmax.xlane.f32.xlu0 %v50
  %v52 = vpop.xlane.xlu0 %51
  %v53 = vsub.f32 %v47, %v52
  %v54 = vmul.f32 %v53, 1.442695
  %v55 = vpow.pop %v54
  %v56 = vsel %vm49, %v55, 0.0
  %57 = vadd.xlane.f32.xlu0 %v56
  %v58 = vpop.xlane.xlu0 %57
  %v59 = vrcp.pop %v58
  %v60 = vmul.f32 %v55, %v59
  %v61 = vadd.f32 %v60, 0.0
  %vm62 = vcmask 523520
  %v63 = vsel %vm62, %v47, -inf
  %64 = vmax.xlane.f32.xlu0 %v63
  %v65 = vpop.xlane.xlu0 %64
  %v66 = vsub.f32 %v47, %v65
  %v67 = vmul.f32 %v66, 1.442695
  %v68 = vpow.pop %v67
  %70 = vrot.lane.b32.xlu0 %v68, 96
  %v71 = vpop.permute.xlu0 %70
  %v73 = vsel %vm49, %v71, 0.0
  %74 = vadd.xlane.f32.xlu0 %v73
  %v75 = vpop.xlane.xlu0 %74
  %v76 = vrcp.pop %v75
  %v77 = vmul.f32 %v68, %v76
  %79 = vrot.lane.b32.xlu0 %v77, 96
  %v80 = vpop.permute.xlu0 %79
  %v82 = vadd.f32 %v61, %v80
  %vm83 = vcmask 785920
  %v84 = vsel %vm83, %v47, -inf
  %85 = vmax.xlane.f32.xlu0 %v84
  %v86 = vpop.xlane.xlu0 %85
  %v87 = vsub.f32 %v47, %v86
  %v88 = vmul.f32 %v87, 1.442695
  %v89 = vpow.pop %v88
  %91 = vrot.lane.b32.xlu0 %v89, 64
  %v92 = vpop.permute.xlu0 %91
  %v94 = vsel %vm49, %v92, 0.0
  %95 = vadd.xlane.f32.xlu0 %v94
  %v96 = vpop.xlane.xlu0 %95
  %v97 = vrcp.pop %v96
  %v98 = vmul.f32 %v89, %v97
  %100 = vrot.lane.b32.xlu0 %v98, 64
  %v101 = vpop.permute.xlu0 %100
  %v103 = vadd.f32 %v82, %v101
  %vm104 = vcmask 1048320
  %v105 = vsel %vm104, %v47, -inf
  %106 = vmax.xlane.f32.xlu0 %v105
  %v107 = vpop.xlane.xlu0 %106
  %v108 = vsub.f32 %v47, %v107
  %v109 = vmul.f32 %v108, 1.442695
  %v110 = vpow.pop %v109
  %112 = vrot.lane.b32.xlu0 %v110, 32
  %v113 = vpop.permute.xlu0 %112
  %v115 = vsel %vm49, %v113, 0.0
  %116 = vadd.xlane.f32.xlu0 %v115
  %v117 = vpop.xlane.xlu0 %116
  %v118 = vrcp.pop %v117
  %v119 = vmul.f32 %v110, %v118
  %121 = vrot.lane.b32.xlu0 %v119, 32
  %v122 = vpop.permute.xlu0 %121
  %v124 = vadd.f32 %v103, %v122
  %v125 = vmul.f32 %v124, 0.25
  %v126 = vsel %vm49, %v125, -inf
  %127 = vmax.xlane.f32.xlu0 %v126
  %v128 = vpop.xlane.xlu0 %127
  %v129 = vsub.f32 %v125, %v128
  %v130 = vmul.f32 %v129, 1.442695
  %v131 = vpow.pop %v130
  %v132 = vsel %vm49, %v131, 0.0
  %133 = vadd.xlane.f32.xlu0 %v132
  %v134 = vpop.xlane.xlu0 %133
  %v135 = vrcp.pop %v134
  %v136 = vmul.f32 %v131, %v135
  %v137 = vld [vmem:[%s2] sm:$0xff]
  %v138 = vld [vmem:[%s2 + $0x8] sm:$0xff]
  %v139 = vld [vmem:[%s2 + $0x10] sm:$0xff]
  %v140 = vld [vmem:[%s2 + $0x18] sm:$0xff]
  %v141 = vld [vmem:[%s2 + $0x20] sm:$0x1]
  %v142 = vperm.slane %v141, 0
  %v144 = vsel %vm49, %v136, 0
  %146 = vmatpush.msra.mxu0 0.0
  %147 = vmatpush.msra.mxu0 0.0
  %148 = vmatpush.msra.mxu0 0.0
  %149 = vmatpush.msra.mxu0 0.0
  %150 = vmatpush.msra.mxu0 0.0
  %151 = vmatpush.msra.mxu0 0.0
  %152 = vmatpush.msra.mxu0 0.0
  %153 = vmatpush.msra.mxu0 0.0
  %154 = vmatpush.msra.mxu0 0.0
  %155 = vmatpush.msra.mxu0 0.0
  %156 = vmatpush.msra.mxu0 0.0
  %157 = vmatpush.msra.mxu0 0.0
  %158 = vmatpush.msra.mxu0 %v140
  %159 = vmatpush.msra.mxu0 %v139
  %160 = vmatpush.msra.mxu0 %v138
  %161 = vmatpush.msra.mxu0 %v137
  %162 = vmatmul.f32.gmra.mxu0 %v144
  %v163 = vpop.f32.mrf.mxu0
  %v164 = vadd.f32 %v142, %v163
  %165 = vdwg.mxu0
  %v166 = vand.u32 2147483647, %v164
  %v167 = vsub.f32 0.0, %v166
  %v168 = vmul.f32 %v167, 1.442695
  %v169 = vpow.pop %v168
  %v170 = vadd.f32 %v169, 1.0
  %v171 = vlog2.pop %v170
  %v172 = vmul.f32 %v171, 0.6931472
  %v173 = vmul.f32 -0.5, %v169
  %v174 = vadd.f32 %v173, 1.0
  %v175 = vmul.f32 %v174, %v169
  %v176 = vand.u32 2147483647, %v169
  %vm177 = vcmp.lt.f32.partialorder %v176, 0.0004427343
  %v178 = vsel %vm177, %v175, %v172
  %v179 = vmax.f32 %v164, 0.0
  %v180 = vadd.f32 %v178, %v179
  %v181 = vadd.f32 %v180, 0.01
  %183 = vrot.lane.b32.xlu0 %v181, 26
  %v184 = vpop.permute.xlu0 %183
  %v186 = vmul.f32 %v14, %v184
  %188 = vrot.lane.b32.xlu0 %v186, 94
  %v189 = vpop.permute.xlu0 %188
  %v191 = vadd.f32 %v164, %v189
  %v192 = vlaneseq
  %v193 = vand.u32 %v192, 127
  %vm194 = vcmask 64512
  %v195 = vsel %vm194, %v191, -inf
  %196 = vmax.xlane.f32.xlu0 %v195
  %v197 = vpop.xlane.xlu0 %196
  %vm198 = vcmp.eq.f32.partialorder %v191, %v197
  %v199 = vsel %vm198, %v193, 8
  %v200 = vsel %vm194, %v199, 2147483647
  %v201 = vand.u32 %v200, 65535
  %v202 = vshra.s32 %v200, 16
  %v203 = vcvt.s32.f32 %v201
  %v204 = vcvt.s32.f32 %v202
  %205 = vmin.xlane.f32.xlu0 %v204
  %v206 = vpop.xlane.xlu0 %205
  %vm207 = vcmp.eq.f32.partialorder %v204, %v206
  %v208 = vsel %vm207, %v203, inf
  %209 = vmin.xlane.f32.xlu0 %v208
  %v210 = vpop.xlane.xlu0 %209
  %v211 = vcvt.f32.s32 %v210
  %v212 = vcvt.f32.s32 %v206
  %v213 = vshll.u32 %v212, 16
  %v214 = vadd.s32 %v213, %v211
  %vm215 = vcmp.eq.s32.totalorder %v193, %v214
  %v216 = vsel %vm215, -inf, %v191
  %v217 = vsel %vm194, %v216, -inf
  %218 = vmax.xlane.f32.xlu0 %v217
  %v219 = vpop.xlane.xlu0 %218
  %vm220 = vcmp.eq.f32.partialorder %v216, %v219
  %v221 = vsel %vm220, %v193, 8
  %v222 = vsel %vm194, %v221, 2147483647
  %v223 = vand.u32 %v222, 65535
  %v224 = vshra.s32 %v222, 16
  %v225 = vcvt.s32.f32 %v223
  %v226 = vcvt.s32.f32 %v224
  %227 = vmin.xlane.f32.xlu0 %v226
  %v228 = vpop.xlane.xlu0 %227
  %vm229 = vcmp.eq.f32.partialorder %v226, %v228
  %v230 = vsel %vm229, %v225, inf
  %231 = vmin.xlane.f32.xlu0 %v230
  %v232 = vpop.xlane.xlu0 %231
  %v233 = vcvt.f32.s32 %v232
  %v234 = vcvt.f32.s32 %v228
  %v235 = vshll.u32 %v234, 16
  %v236 = vadd.s32 %v235, %v233
  %v237 = vsub.f32 %v219, %v197
  %v238 = vmul.f32 %v237, 1.442695
  %v239 = vpow.pop %v238
  %v240 = vadd.f32 %v239, 1.0
  %v241 = vrcp.pop %v240
  %v242 = vmul.f32 %v240, %v241
  %v243 = vsub.f32 1.0, %v242
  %v244 = vmul.f32 %v241, %v243
  %v245 = vadd.f32 %v241, %v244
  %vm246 = vweird.f32 %v240
  %vm247 = vweird.f32 %v241
  %vm248 = vmor %vm246, %vm247
  %v249 = vsel %vm248, %v241, %v245
  %v250 = vand.u32 2147483647, %v240
  %vm251 = vcmp.eq.f32.partialorder %v250, 8.507059e+37
  %v252 = vand.u32 %v240, 2147483648
  %v253 = vor.u32 1.1754944e-38, %v252
  %v254 = vsel %vm251, %v253, %v249
  %v255 = vmul.f32 1.0, %v254
  %v256 = vsel %vm215, %v255, 0.0
  %v257 = vadd.f32 %v256, 0.0
  %vm258 = vcmp.eq.s32.totalorder %v193, %v236
  %v259 = vmul.f32 %v239, %v255
  %v260 = vsel %vm258, %v259, 0.0
  %v261 = vadd.f32 %v257, %v260
  %262 = vst [vmem:[%s3] sm:$0xff] %v261
  // Predicated region
  $region14: #{moe_gate_pallas.1} parent=0 // pred_check
    _
  $region15: #{moe_gate_pallas.1} parent=0 // pred_check_branch
    %264 = sbr.rel (0) target = $region17
  $region16: #{moe_gate_pallas.1} parent=0 // pred_region
    _
  $region17: #{moe_gate_pallas.1} parent=0 // pred_fallthru
    _
  // Predicated region
  $region18: #{moe_gate_pallas.1} parent=0 // pred_check
    _
  $region19: #{moe_gate_pallas.1} parent=0 // pred_check_branch
    %266 = sbr.rel (0) target = $region21
  $region20: #{moe_gate_pallas.1} parent=0 // pred_region
    _
  $region21: #{moe_gate_pallas.1} parent=0 // pred_fallthru
    _

</llo_original>
